<compile_context>
chip_gen: v7x
topology: tpu7x:2x2x1
jax: 0.10.0
libtpu: 0.0.40
codegen_flags: <defaults>
</compile_context>

<pallas_src>
import functools

import jax
import jax.numpy as jnp
from jax.experimental import pallas as pl
from jax.experimental.pallas import tpu as pltpu


def _round_up(x, m):
    return ((x + m - 1) // m) * m


def _multi_focal_kernel(pred_ref, tgt_ref, alpha_ref, out_ref, *,
                        gamma, v_on, v_off, eps, n_valid, tile_n):
    """One batch tile: per-tile partial sums of alpha[target] and focal term.

    pred_ref  : (TN, C) float  VMEM   logits tile
    tgt_ref   : (TN, 1) int32  VMEM   class indices
    alpha_ref : (1, C)  f32    VMEM   per-class alpha (resident)
    out_ref   : (8, 128) f32   VMEM   sublane0 = sum(alpha_t), sublane1 = sum(focal)
    """
    x = pred_ref[...].astype(jnp.float32)                 # (TN, C)
    tn, c = x.shape

    # Row-stable softmax pieces (never materialize log-softmax / full softmax*onehot).
    m = jnp.max(x, axis=-1, keepdims=True)                # (TN, 1)  XLU
    e = jnp.exp(x - m)                                    # (TN, C)  EUP
    s = jnp.sum(e, axis=-1, keepdims=True)                # (TN, 1)  XLU

    # One-hot "scatter_" replaced by a lane-iota compare.
    tgt = tgt_ref[...]                                    # (TN, 1) int32
    class_ids = jax.lax.broadcasted_iota(jnp.int32, (tn, c), 1)
    hit = class_ids == tgt                                # (TN, C)

    e_t = jnp.sum(jnp.where(hit, e, 0.0), axis=-1, keepdims=True)   # (TN, 1)

    # pt = sum_c clamp(one_hot)_c * softmax_c + eps
    #    = (v_off * (s - e_t) + v_on * e_t) / s + eps
    pt = (v_off * (s - e_t) + v_on * e_t) / s + eps       # (TN, 1)
    logpt = jnp.log(pt)

    one_minus = 1.0 - pt
    g = float(gamma)
    if g.is_integer() and 0.0 <= g <= 16.0:
        # Integer power via repeated multiply (matches torch.pow with int gamma,
        # and is safe for the tiny negative 1-pt = -eps case).
        w = jnp.ones_like(one_minus)
        for _ in range(int(g)):
            w = w * one_minus
    else:
        w = jnp.power(jnp.maximum(one_minus, 0.0), g)

    focal = -(w * logpt)                                  # (TN, 1)

    # alpha gathered at the target class (reuses `hit`).
    alpha_row = alpha_ref[...]                            # (1, C)
    alpha_t = jnp.sum(jnp.where(hit, alpha_row, 0.0), axis=-1, keepdims=True)

    # Mask padded rows of the last partial tile.
    row = (pl.program_id(0) * tile_n
           + jax.lax.broadcasted_iota(jnp.int32, (tn, 1), 0))
    valid = row < n_valid
    sum_f = jnp.sum(jnp.where(valid, focal, 0.0))
    sum_a = jnp.sum(jnp.where(valid, alpha_t, 0.0))

    # Lane-dense (8,128) partial-sum tile (unmasked vst; one block per grid step).
    sub = jax.lax.broadcasted_iota(jnp.int32, (8, 128), 0)
    out_ref[...] = jnp.where(sub == 0, sum_a,
                             jnp.where(sub == 1, sum_f, 0.0))


def _build_alpha_vec(num_class, alpha, balance_index):
    """Mirror MultiFocalLoss.__init__ alpha handling."""
    if alpha is None:
        return jnp.ones((num_class,), jnp.float32)
    if isinstance(alpha, float):
        vec = jnp.full((num_class,), 1.0 - alpha, jnp.float32)
        return vec.at[balance_index].set(alpha)
    vec = jnp.asarray(alpha, jnp.float32).reshape(num_class)
    return vec / jnp.sum(vec)


def multi_focal_loss(pred, target, *, num_class, alpha=None, gamma=2,
                     balance_index=-1, smooth=None, size_average=True,
                     tile_rows=512):
    """Pallas-backed forward of MultiFocalLoss."""
    if smooth is not None and (smooth < 0 or smooth > 1.0):
        raise ValueError('smooth value should be in [0,1]')

    # (B, C, *spatial) -> (B*prod(spatial), C), same as the torch forward
    # (softmax over dim=1 commutes with this reshape/permute).
    if pred.ndim > 2:
        b, c = pred.shape[0], pred.shape[1]
        pred2 = jnp.transpose(pred.reshape(b, c, -1), (0, 2, 1)).reshape(-1, c)
    else:
        pred2 = pred
    n, c = pred2.shape
    assert c == num_class
    tgt2 = target.reshape(-1).astype(jnp.int32)

    alpha_vec = _build_alpha_vec(num_class, alpha, balance_index).reshape(1, c)

    # Smoothed one-hot values: torch.clamp(one_hot, smooth, 1-smooth).
    if smooth:
        v_on = min(max(1.0, float(smooth)), 1.0 - float(smooth))
        v_off = min(max(0.0, float(smooth)), 1.0 - float(smooth))
    else:
        v_on, v_off = 1.0, 0.0

    # Tile sizing: keep the double-buffered pred tile well under scoped VMEM
    # on every generation (v7x has only 32 MiB scoped / 64 MiB physical).
    itemsize = jnp.dtype(pred2.dtype).itemsize
    per_buffer_budget = 8 * 1024 * 1024            # ~16 MiB once double-buffered
    max_rows = max(8, per_buffer_budget // max(1, c * itemsize))
    tn = min(int(tile_rows), int(max_rows), _round_up(n, 8))
    tn = max(8, (tn // 8) * 8)
    n_pad = _round_up(n, tn)
    grid_n = n_pad // tn
    # TODO(synk): vocab-scale num_class (>=~32k) needs a second grid axis over C
    # with online accumulators; current kernel keeps the whole class row per tile.

    if n_pad != n:
        pred2 = jnp.pad(pred2, ((0, n_pad - n), (0, 0)))
        tgt2 = jnp.pad(tgt2, ((0, n_pad - n),))
    tgt2 = tgt2.reshape(n_pad, 1)

    kernel = functools.partial(
        _multi_focal_kernel,
        gamma=float(gamma), v_on=v_on, v_off=v_off, eps=1e-10,
        n_valid=n, tile_n=tn)

    partials = pl.pallas_call(
        kernel,
        out_shape=jax.ShapeDtypeStruct((grid_n * 8, 128), jnp.float32),
        grid_spec=pltpu.PrefetchScalarGridSpec(
            num_scalar_prefetch=0,
            grid=(grid_n,),
            in_specs=[
                pl.BlockSpec((tn, c), lambda i: (i, 0)),   # pred tile
                pl.BlockSpec((tn, 1), lambda i: (i, 0)),   # target tile
                pl.BlockSpec((1, c), lambda i: (0, 0)),    # alpha (resident)
            ],
            out_specs=pl.BlockSpec((8, 128), lambda i: (i, 0)),
        ),
        compiler_params=pltpu.CompilerParams(
            dimension_semantics=("parallel",),
            vmem_limit_bytes=32 * 1024 * 1024),
    )(pred2, tgt2, alpha_vec)

    # f32 reduction of per-tile partial sums in the wrapper.
    sum_a = jnp.sum(partials[0::8, 0])
    sum_f = jnp.sum(partials[1::8, 0])

    # Faithful to the torch broadcast: loss is (N,1,N) before reduction, which
    # factorizes into (sum of alpha[target]) * (sum of focal terms).
    if size_average:
        return (sum_a / n) * (sum_f / n)
    return sum_a * sum_f


def _reference_multi_focal_loss(pred, target, *, num_class, alpha=None, gamma=2,
                                balance_index=-1, smooth=None, size_average=True):
    """Pure-JAX literal port of the PyTorch forward (including its broadcast)."""
    logit = jax.nn.softmax(pred.astype(jnp.float32), axis=1)
    if logit.ndim > 2:
        b, c = logit.shape[0], logit.shape[1]
        logit = jnp.transpose(logit.reshape(b, c, -1), (0, 2, 1)).reshape(-1, c)
    tgt = target.reshape(-1, 1).astype(jnp.int32)
    eps = 1e-10
    alpha_vec = _build_alpha_vec(num_class, alpha, balance_index).reshape(num_class, 1)
    one_hot = jax.nn.one_hot(tgt.reshape(-1), num_class, dtype=jnp.float32)
    if smooth:
        one_hot = jnp.clip(one_hot, smooth, 1.0 - smooth)
    pt = jnp.sum(one_hot * logit, axis=1) + eps          # (N,)
    logpt = jnp.log(pt)
    alpha_g = alpha_vec[tgt]                             # (N, 1, 1)
    loss = -1.0 * alpha_g * jnp.power(1.0 - pt, gamma) * logpt   # (N, 1, N)
    return jnp.mean(loss) if size_average else jnp.sum(loss)


if __name__ == "__main__":
    key = jax.random.PRNGKey(0)
    k1, k2, k3, k4 = jax.random.split(key, 4)

    # Case 1: 2-D logits, default config (alpha=None, gamma=2, no smoothing).
    # N not a multiple of 8 to exercise padding + row masking.
    N1, C1 = 37, 7
    pred1 = jax.random.normal(k1, (N1, C1), dtype=jnp.float32)
    tgt1 = jax.random.randint(k2, (N1,), 0, C1, dtype=jnp.int32)
    out1 = multi_focal_loss(pred1, tgt1, num_class=C1)
    ref1 = _reference_multi_focal_loss(pred1, tgt1, num_class=C1)
    out1, ref1 = jax.block_until_ready((out1, ref1))
    assert jnp.allclose(out1, ref1, rtol=1e-4, atol=1e-6), (out1, ref1)

    # Case 2: 4-D segmentation-style logits (B, C, H, W), list alpha + smoothing.
    B, C2, H, W = 2, 5, 8, 8
    pred2 = jax.random.normal(k3, (B, C2, H, W), dtype=jnp.float32)
    tgt2 = jax.random.randint(k4, (B, H, W), 0, C2, dtype=jnp.int32)
    alpha_list = [1.0, 2.0, 0.5, 1.0, 3.0]
    out2 = multi_focal_loss(pred2, tgt2, num_class=C2, alpha=alpha_list,
                            gamma=2, smooth=0.1, size_average=True)
    ref2 = _reference_multi_focal_loss(pred2, tgt2, num_class=C2, alpha=alpha_list,
                                       gamma=2, smooth=0.1, size_average=True)
    out2, ref2 = jax.block_until_ready((out2, ref2))
    assert jnp.allclose(out2, ref2, rtol=1e-4, atol=1e-6), (out2, ref2)

    print("KERNEL_OK")
</pallas_src>

<mosaic_0001>
module attributes {stable_mosaic.version = 11 : i64} {
  func.func @_multi_focal_kernel(%arg0: i32, %arg1: memref<40x7xf32, #tpu.memory_space<vmem>>, %arg2: memref<40x1xi32, #tpu.memory_space<vmem>>, %arg3: memref<1x7xf32, #tpu.memory_space<vmem>>, %arg4: memref<8x128xf32, #tpu.memory_space<vmem>>) attributes {dimension_semantics = [#tpu.dimension_semantics<parallel>], iteration_bounds = array<i64: 1>, scalar_prefetch = 0 : i64, scratch_operands = 0 : i64, tpu.core_type = #tpu.core_type<tc>, window_params = [{transform_indices = @transform_0, window_bounds = array<i64: 40, 7>}, {transform_indices = @transform_1, window_bounds = array<i64: 40, 1>}, {pipeline_mode = #tpu.pipeline_mode<synchronous>, transform_indices = @transform_2, window_bounds = array<i64: 1, 7>}, {transform_indices = @transform_3, window_bounds = array<i64: 8, 128>}]} {
    %c0 = arith.constant 0 : index
    %c0_0 = arith.constant 0 : index
    %0 = vector.load %arg1[%c0, %c0_0] : memref<40x7xf32, #tpu.memory_space<vmem>>, vector<40x7xf32>
    %cst = arith.constant dense<0xFF800000> : vector<40xf32>
    %1 = vector.multi_reduction <maximumf>, %0, %cst [1] : vector<40x7xf32> to vector<40xf32>
    %2 = vector.shape_cast %1 : vector<40xf32> to vector<40x1xf32>
    %3 = vector.broadcast %2 : vector<40x1xf32> to vector<40x7xf32>
    %4 = arith.subf %0, %3 : vector<40x7xf32>
    %5 = math.exp %4 : vector<40x7xf32>
    %cst_1 = arith.constant dense<0.000000e+00> : vector<40xf32>
    %6 = vector.multi_reduction <add>, %5, %cst_1 [1] : vector<40x7xf32> to vector<40xf32>
    %7 = vector.shape_cast %6 : vector<40xf32> to vector<40x1xf32>
    %c0_2 = arith.constant 0 : index
    %c0_3 = arith.constant 0 : index
    %8 = vector.load %arg2[%c0_2, %c0_3] : memref<40x1xi32, #tpu.memory_space<vmem>>, vector<40x1xi32>
    %9 = tpu.iota {dimensions = array<i32: 1>} : vector<40x7xi32>
    %10 = vector.broadcast %8 : vector<40x1xi32> to vector<40x7xi32>
    %11 = arith.cmpi eq, %9, %10 : vector<40x7xi32>
    %cst_4 = arith.constant 0.000000e+00 : f32
    %12 = vector.broadcast %cst_4 : f32 to vector<40x7xf32>
    %13 = arith.select %11, %5, %12 : vector<40x7xi1>, vector<40x7xf32>
    %cst_5 = arith.constant dense<0.000000e+00> : vector<40xf32>
    %14 = vector.multi_reduction <add>, %13, %cst_5 [1] : vector<40x7xf32> to vector<40xf32>
    %15 = vector.shape_cast %14 : vector<40xf32> to vector<40x1xf32>
    %16 = arith.subf %7, %15 : vector<40x1xf32>
    %cst_6 = arith.constant 0.000000e+00 : f32
    %17 = vector.broadcast %cst_6 : f32 to vector<40x1xf32>
    %18 = arith.mulf %17, %16 : vector<40x1xf32>
    %cst_7 = arith.constant 1.000000e+00 : f32
    %19 = vector.broadcast %cst_7 : f32 to vector<40x1xf32>
    %20 = arith.mulf %19, %15 : vector<40x1xf32>
    %21 = arith.addf %18, %20 : vector<40x1xf32>
    %22 = arith.divf %21, %7 : vector<40x1xf32>
    %cst_8 = arith.constant 1.000000e-10 : f32
    %23 = vector.broadcast %cst_8 : f32 to vector<40x1xf32>
    %24 = arith.addf %22, %23 : vector<40x1xf32>
    %25 = math.log %24 : vector<40x1xf32>
    %cst_9 = arith.constant 1.000000e+00 : f32
    %26 = vector.broadcast %cst_9 : f32 to vector<40x1xf32>
    %27 = arith.subf %26, %24 : vector<40x1xf32>
    %cst_10 = arith.constant 1.000000e+00 : f32
    %28 = vector.broadcast %cst_10 : f32 to vector<40x1xf32>
    %29 = arith.mulf %28, %27 : vector<40x1xf32>
    %30 = arith.mulf %29, %27 : vector<40x1xf32>
    %31 = arith.mulf %30, %25 : vector<40x1xf32>
    %cst_11 = arith.constant 0.000000e+00 : f32
    %32 = vector.broadcast %cst_11 : f32 to vector<40x1xf32>
    %33 = arith.subf %32, %31 : vector<40x1xf32>
    %c0_12 = arith.constant 0 : index
    %c0_13 = arith.constant 0 : index
    %34 = vector.load %arg3[%c0_12, %c0_13] : memref<1x7xf32, #tpu.memory_space<vmem>>, vector<1x7xf32>
    %cst_14 = arith.constant 0.000000e+00 : f32
    %35 = vector.shape_cast %34 : vector<1x7xf32> to vector<1x7xf32>
    %36 = vector.broadcast %35 : vector<1x7xf32> to vector<40x7xf32>
    %37 = vector.broadcast %cst_14 : f32 to vector<40x7xf32>
    %38 = arith.select %11, %36, %37 : vector<40x7xi1>, vector<40x7xf32>
    %cst_15 = arith.constant dense<0.000000e+00> : vector<40xf32>
    %39 = vector.multi_reduction <add>, %38, %cst_15 [1] : vector<40x7xf32> to vector<40xf32>
    %40 = vector.shape_cast %39 : vector<40xf32> to vector<40x1xf32>
    %c40_i32 = arith.constant 40 : i32
    %41 = arith.muli %arg0, %c40_i32 : i32
    %42 = tpu.iota {dimensions = array<i32: 0>} : vector<40x1xi32>
    %43 = vector.broadcast %41 : i32 to vector<40x1xi32>
    %44 = arith.addi %43, %42 : vector<40x1xi32>
    %c37_i32 = arith.constant 37 : i32
    %45 = vector.broadcast %c37_i32 : i32 to vector<40x1xi32>
    %46 = arith.cmpi slt, %44, %45 : vector<40x1xi32>
    %cst_16 = arith.constant 0.000000e+00 : f32
    %47 = vector.broadcast %cst_16 : f32 to vector<40x1xf32>
    %48 = arith.select %46, %33, %47 : vector<40x1xi1>, vector<40x1xf32>
    %49 = vector.shape_cast %48 : vector<40x1xf32> to vector<1x40x1xf32>
    %cst_17 = arith.constant dense<0.000000e+00> : vector<1xf32>
    %50 = vector.multi_reduction <add>, %49, %cst_17 [1, 2] : vector<1x40x1xf32> to vector<1xf32>
    %51 = vector.shape_cast %50 : vector<1xf32> to vector<1x1x1xf32>
    %52 = vector.extract %51[0, 0, 0] : f32 from vector<1x1x1xf32>
    %cst_18 = arith.constant 0.000000e+00 : f32
    %53 = vector.broadcast %cst_18 : f32 to vector<40x1xf32>
    %54 = arith.select %46, %40, %53 : vector<40x1xi1>, vector<40x1xf32>
    %55 = vector.shape_cast %54 : vector<40x1xf32> to vector<1x40x1xf32>
    %cst_19 = arith.constant dense<0.000000e+00> : vector<1xf32>
    %56 = vector.multi_reduction <add>, %55, %cst_19 [1, 2] : vector<1x40x1xf32> to vector<1xf32>
    %57 = vector.shape_cast %56 : vector<1xf32> to vector<1x1x1xf32>
    %58 = vector.extract %57[0, 0, 0] : f32 from vector<1x1x1xf32>
    %59 = tpu.iota {dimensions = array<i32: 0>} : vector<8x128xi32>
    %c0_i32 = arith.constant 0 : i32
    %60 = vector.broadcast %c0_i32 : i32 to vector<8x128xi32>
    %61 = arith.cmpi eq, %59, %60 : vector<8x128xi32>
    %c1_i32 = arith.constant 1 : i32
    %62 = vector.broadcast %c1_i32 : i32 to vector<8x128xi32>
    %63 = arith.cmpi eq, %59, %62 : vector<8x128xi32>
    %cst_20 = arith.constant 0.000000e+00 : f32
    %64 = vector.broadcast %52 : f32 to vector<8x128xf32>
    %65 = vector.broadcast %cst_20 : f32 to vector<8x128xf32>
    %66 = arith.select %63, %64, %65 : vector<8x128xi1>, vector<8x128xf32>
    %67 = vector.broadcast %58 : f32 to vector<8x128xf32>
    %68 = arith.select %61, %67, %66 : vector<8x128xi1>, vector<8x128xf32>
    %c0_21 = arith.constant 0 : index
    %c0_22 = arith.constant 0 : index
    %69 = vector.load %arg4[%c0_21, %c0_22] : memref<8x128xf32, #tpu.memory_space<vmem>>, vector<8x128xf32>
    tpu.vector_store %arg4[%c0_21, %c0_22], %68 {strides = array<i32>} : memref<8x128xf32, #tpu.memory_space<vmem>>, vector<8x128xf32>,
    return
  }
  func.func @transform_0(%arg0: i32) -> (i32, i32) {
    %c0_i32 = arith.constant 0 : i32
    %c0_i32_0 = arith.constant 0 : i32
    return %arg0, %c0_i32 : i32, i32
  }
  func.func @transform_1(%arg0: i32) -> (i32, i32) {
    %c0_i32 = arith.constant 0 : i32
    %c0_i32_0 = arith.constant 0 : i32
    return %arg0, %c0_i32 : i32, i32
  }
  func.func @transform_2(%arg0: i32) -> (i32, i32) {
    %c0_i32 = arith.constant 0 : i32
    %c0_i32_0 = arith.constant 0 : i32
    %c0_i32_1 = arith.constant 0 : i32
    return %c0_i32, %c0_i32_0 : i32, i32
  }
  func.func @transform_3(%arg0: i32) -> (i32, i32) {
    %c0_i32 = arith.constant 0 : i32
    %c0_i32_0 = arith.constant 0 : i32
    return %arg0, %c0_i32 : i32, i32
  }
}

</mosaic_0001>

<llo_original>
// kernel: tpu_custom_call.1
$region0: #{tpu_custom_call.1}
  #allocation0 [shape = 'u32[]', space=smem, size = 0x4, offset = 0x4, fixed_abs, tag = 'smem constant byte address 0x4 - core index']
  #allocation1 [shape = 'u32[144,128]{1,0:T(1,128)}', space=vmem, size = 0x12000, scoped, tag = 'internal scratch']
  %s0 = inlined_call_operand.vmem [shape: f32[40,7], index: 0, kind: input, shape index: {}]
  %s1 = inlined_call_operand.vmem [shape: s32[40,1], index: 1, kind: input, shape index: {}]
  %s2 = inlined_call_operand.vmem [shape: f32[1,7], index: 2, kind: input, shape index: {}]
  %s3 = inlined_call_operand.hbm [shape: f32[8,128], index: 3, kind: output, shape index: {}]
  %s4 = sld [smem:[#allocation0]]
  $region22: #{tpu_custom_call.1} parent=0
    _
  %s6 = ssub.s32 1, %s4
  %s7 = scalar_select 0, %s6, %s4
  $region1: #{tpu_custom_call.1} parent=0
    #allocation2 [shape = 'u8[4096]{0}', space=vmem, size = 0x1000, scoped, tag = 'output window, operand 0, single buffered']
    #allocation3 [shape = 's32[1]{0}', space=sflag, size = 0x4, scoped, tag = 'scoped memory for tpu_custom_call.1']
    %8 = vsyncpa [#allocation3], 0
    // Predicated region
    $region2: #{tpu_custom_call.1} parent=1 // pred_check
      _
    $region3: #{tpu_custom_call.1} parent=1 // pred_check_branch
      %10 = sbr.rel (0) target = $region5
    $region4: #{tpu_custom_call.1} parent=1 // pred_region
      _
    $region5: #{tpu_custom_call.1} parent=1 // pred_fallthru
      _
    // Predicated region
    $region6: #{tpu_custom_call.1} parent=1 // pred_check
      _
    $region7: #{tpu_custom_call.1} parent=1 // pred_check_branch
      %12 = sbr.rel (0) target = $region9
    $region8: #{tpu_custom_call.1} parent=1 // pred_region
      _
    $region9: #{tpu_custom_call.1} parent=1 // pred_fallthru
      _
    // Predicated region
    $region10: #{tpu_custom_call.1} parent=1 // pred_check
      _
    $region11: #{tpu_custom_call.1} parent=1 // pred_check_branch
      %14 = sbr.rel (0) target = $region13
    $region12: #{tpu_custom_call.1} parent=1 // pred_region
      _
    $region13: #{tpu_custom_call.1} parent=1 // pred_fallthru
      _
    %v15 = vld [vmem:[%s0] sm:$0xff]
    %v16 = vld [vmem:[%s0 + $0x8] sm:$0xff]
    %v17 = vld [vmem:[%s0 + $0x10] sm:$0xff]
    %v18 = vld [vmem:[%s0 + $0x18] sm:$0xff]
    %v19 = vld [vmem:[%s0 + $0x20] sm:$0xff]
    %vm20 = vcmask 56320
    %v21 = vsel %vm20, %v15, -inf
    %22 = vmax.xlane.f32.xlu0 %v21
    %v23 = vpop.xlane.xlu0 %22
    %v24 = vsel %vm20, %v16, -inf
    %25 = vmax.xlane.f32.xlu0 %v24
    %v26 = vpop.xlane.xlu0 %25
    %v27 = vsel %vm20, %v17, -inf
    %28 = vmax.xlane.f32.xlu0 %v27
    %v29 = vpop.xlane.xlu0 %28
    %v30 = vsel %vm20, %v18, -inf
    %31 = vmax.xlane.f32.xlu0 %v30
    %v32 = vpop.xlane.xlu0 %31
    %v33 = vsel %vm20, %v19, -inf
    %34 = vmax.xlane.f32.xlu0 %v33
    %v35 = vpop.xlane.xlu0 %34
    %v36 = vsub.f32 %v15, %v23
    %v37 = vsub.f32 %v16, %v26
    %v38 = vsub.f32 %v17, %v29
    %v39 = vsub.f32 %v18, %v32
    %v40 = vsub.f32 %v19, %v35
    %v41 = vmul.f32 %v36, 1.442695
    %v42 = vpow.pop %v41
    %v43 = vmul.f32 %v37, 1.442695
    %v44 = vpow.pop %v43
    %v45 = vmul.f32 %v38, 1.442695
    %v46 = vpow.pop %v45
    %v47 = vmul.f32 %v39, 1.442695
    %v48 = vpow.pop %v47
    %v49 = vmul.f32 %v40, 1.442695
    %v50 = vpow.pop %v49
    %v51 = vsel %vm20, %v42, 0.0
    %52 = vadd.xlane.f32.xlu0 %v51
    %v53 = vpop.xlane.xlu0 %52
    %v54 = vsel %vm20, %v44, 0.0
    %55 = vadd.xlane.f32.xlu0 %v54
    %v56 = vpop.xlane.xlu0 %55
    %v57 = vsel %vm20, %v46, 0.0
    %58 = vadd.xlane.f32.xlu0 %v57
    %v59 = vpop.xlane.xlu0 %58
    %v60 = vsel %vm20, %v48, 0.0
    %61 = vadd.xlane.f32.xlu0 %v60
    %v62 = vpop.xlane.xlu0 %61
    %v63 = vsel %vm20, %v50, 0.0
    %64 = vadd.xlane.f32.xlu0 %v63
    %v65 = vpop.xlane.xlu0 %64
    %v66 = vld [vmem:[%s1] sm:$0xff]
    %v67 = vld [vmem:[%s1 + $0x8] sm:$0xff]
    %v68 = vld [vmem:[%s1 + $0x10] sm:$0xff]
    %v69 = vld [vmem:[%s1 + $0x18] sm:$0xff]
    %v70 = vld [vmem:[%s1 + $0x20] sm:$0xff]
    %v71 = vlaneseq
    %v72 = vand.u32 %v71, 127
    %73 = vset.pattern.permute.xlu0 0
    %74 = vperm.xlu0 %73, %v66
    %v75 = vpop.permute.xlu0 %74
    %76 = vset.pattern.permute.xlu0 0
    %77 = vperm.xlu0 %76, %v67
    %v78 = vpop.permute.xlu0 %77
    %79 = vset.pattern.permute.xlu0 0
    %80 = vperm.xlu0 %79, %v68
    %v81 = vpop.permute.xlu0 %80
    %82 = vset.pattern.permute.xlu0 0
    %83 = vperm.xlu0 %82, %v69
    %v84 = vpop.permute.xlu0 %83
    %85 = vset.pattern.permute.xlu0 0
    %86 = vperm.xlu0 %85, %v70
    %v87 = vpop.permute.xlu0 %86
    %vm88 = vcmp.eq.s32.totalorder %v72, %v75
    %vm89 = vcmp.eq.s32.totalorder %v72, %v78
    %vm90 = vcmp.eq.s32.totalorder %v72, %v81
    %vm91 = vcmp.eq.s32.totalorder %v72, %v84
    %vm92 = vcmp.eq.s32.totalorder %v72, %v87
    %v93 = vsel %vm88, %v42, 0.0
    %v94 = vsel %vm89, %v44, 0.0
    %v95 = vsel %vm90, %v46, 0.0
    %v96 = vsel %vm91, %v48, 0.0
    %v97 = vsel %vm92, %v50, 0.0
    %v98 = vsel %vm20, %v93, 0.0
    %99 = vadd.xlane.f32.xlu0 %v98
    %v100 = vpop.xlane.xlu0 %99
    %v101 = vsel %vm20, %v94, 0.0
    %102 = vadd.xlane.f32.xlu0 %v101
    %v103 = vpop.xlane.xlu0 %102
    %v104 = vsel %vm20, %v95, 0.0
    %105 = vadd.xlane.f32.xlu0 %v104
    %v106 = vpop.xlane.xlu0 %105
    %v107 = vsel %vm20, %v96, 0.0
    %108 = vadd.xlane.f32.xlu0 %v107
    %v109 = vpop.xlane.xlu0 %108
    %v110 = vsel %vm20, %v97, 0.0
    %111 = vadd.xlane.f32.xlu0 %v110
    %v112 = vpop.xlane.xlu0 %111
    %v113 = vsub.f32 %v53, %v100
    %v114 = vsub.f32 %v56, %v103
    %v115 = vsub.f32 %v59, %v106
    %v116 = vsub.f32 %v62, %v109
    %v117 = vsub.f32 %v65, %v112
    %v118 = vmul.f32 %v113, 0.0
    %v119 = vmul.f32 %v114, 0.0
    %v120 = vmul.f32 %v115, 0.0
    %v121 = vmul.f32 %v116, 0.0
    %v122 = vmul.f32 %v117, 0.0
    %v123 = vadd.f32 %v118, %v100
    %v124 = vadd.f32 %v119, %v103
    %v125 = vadd.f32 %v120, %v106
    %v126 = vadd.f32 %v121, %v109
    %v127 = vadd.f32 %v122, %v112
    %v128 = vrcp.pop %v53
    %v129 = vmul.f32 %v123, %v128
    %v130 = vrcp.pop %v56
    %v131 = vmul.f32 %v124, %v130
    %v132 = vrcp.pop %v59
    %v133 = vmul.f32 %v125, %v132
    %v134 = vrcp.pop %v62
    %v135 = vmul.f32 %v126, %v134
    %v136 = vrcp.pop %v65
    %v137 = vmul.f32 %v127, %v136
    %v138 = vadd.f32 %v129, 1e-10
    %v139 = vadd.f32 %v131, 1e-10
    %v140 = vadd.f32 %v133, 1e-10
    %v141 = vadd.f32 %v135, 1e-10
    %v142 = vadd.f32 %v137, 1e-10
    %v143 = vlog2.pop %v138
    %v144 = vmul.f32 %v143, 0.6931472
    %v145 = vlog2.pop %v139
    %v146 = vmul.f32 %v145, 0.6931472
    %v147 = vlog2.pop %v140
    %v148 = vmul.f32 %v147, 0.6931472
    %v149 = vlog2.pop %v141
    %v150 = vmul.f32 %v149, 0.6931472
    %v151 = vlog2.pop %v142
    %v152 = vmul.f32 %v151, 0.6931472
    %v153 = vsub.f32 1.0, %v138
    %v154 = vsub.f32 1.0, %v139
    %v155 = vsub.f32 1.0, %v140
    %v156 = vsub.f32 1.0, %v141
    %v157 = vsub.f32 1.0, %v142
    %v158 = vmul.f32 %v153, %v153
    %v159 = vmul.f32 %v154, %v154
    %v160 = vmul.f32 %v155, %v155
    %v161 = vmul.f32 %v156, %v156
    %v162 = vmul.f32 %v157, %v157
    %v163 = vmul.f32 %v158, %v144
    %v164 = vmul.f32 %v159, %v146
    %v165 = vmul.f32 %v160, %v148
    %v166 = vmul.f32 %v161, %v150
    %v167 = vmul.f32 %v162, %v152
    %v168 = vsub.f32 0.0, %v163
    %v169 = vsub.f32 0.0, %v164
    %v170 = vsub.f32 0.0, %v165
    %v171 = vsub.f32 0.0, %v166
    %v172 = vsub.f32 0.0, %v167
    %v173 = vld [vmem:[%s2] sm:$0x1]
    %v175 = vlaneseq
    %v176 = vshrl.u32 %v175, 7
    %v177 = vsub.s32 0, %v176
    %v178 = vrot.slane %v173, %v177
    %v180 = vsel %vm88, %v178, 0.0
    %v181 = vsel %vm89, %v178, 0.0
    %v182 = vsel %vm90, %v178, 0.0
    %v183 = vsel %vm91, %v178, 0.0
    %v184 = vsel %vm92, %v178, 0.0
    %v185 = vsel %vm20, %v180, 0.0
    %186 = vadd.xlane.f32.xlu0 %v185
    %v187 = vpop.xlane.xlu0 %186
    %v188 = vsel %vm20, %v181, 0.0
    %189 = vadd.xlane.f32.xlu0 %v188
    %v190 = vpop.xlane.xlu0 %189
    %v191 = vsel %vm20, %v182, 0.0
    %192 = vadd.xlane.f32.xlu0 %v191
    %v193 = vpop.xlane.xlu0 %192
    %v194 = vsel %vm20, %v183, 0.0
    %195 = vadd.xlane.f32.xlu0 %v194
    %v196 = vpop.xlane.xlu0 %195
    %v197 = vsel %vm20, %v184, 0.0
    %198 = vadd.xlane.f32.xlu0 %v197
    %v199 = vpop.xlane.xlu0 %198
    %s200 = smul.u32 0, 40
    %v201 = vlaneseq
    %v202 = vshrl.u32 %v201, 7
    %v203 = vadd.s32 %v202, 8
    %v204 = vadd.s32 %v202, 16
    %v205 = vadd.s32 %v202, 24
    %v206 = vadd.s32 %v202, 32
    %v207 = vstv %s200
    %v208 = vadd.s32 %v207, %v202
    %v209 = vadd.s32 %v207, %v203
    %v210 = vadd.s32 %v207, %v204
    %v211 = vadd.s32 %v207, %v205
    %v212 = vadd.s32 %v207, %v206
    %vm213 = vcmp.lt.s32.totalorder %v208, 37
    %vm214 = vcmp.lt.s32.totalorder %v209, 37
    %vm215 = vcmp.lt.s32.totalorder %v210, 37
    %vm216 = vcmp.lt.s32.totalorder %v211, 37
    %vm217 = vcmp.lt.s32.totalorder %v212, 37
    %v218 = vsel %vm213, %v168, 0.0
    %v219 = vsel %vm214, %v169, 0.0
    %v220 = vsel %vm215, %v170, 0.0
    %v221 = vsel %vm216, %v171, 0.0
    %v222 = vsel %vm217, %v172, 0.0
    %vm223 = vcmask 7168
    %v224 = vsel %vm223, %v218, 0.0
    %v225 = vsel %vm223, %v219, 0.0
    %v226 = vadd.f32 %v224, %v225
    %v227 = vsel %vm223, %v220, 0.0
    %v228 = vadd.f32 %v226, %v227
    %v229 = vsel %vm223, %v221, 0.0
    %v230 = vadd.f32 %v228, %v229
    %v231 = vsel %vm223, %v222, 0.0
    %v232 = vadd.f32 %v230, %v231
    %233 = vadd.xlane.f32.xlu0 %v232
    %v234 = vpop.xlane.xlu0 %233
    %v235 = vrot.slane %v234, 4
    %v236 = vadd.f32 %v234, %v235
    %v237 = vrot.slane %v236, 2
    %v238 = vadd.f32 %v236, %v237
    %v239 = vrot.slane %v238, 1
    %v240 = vadd.f32 %v238, %v239
    %s241 = vtos %v240
    %v242 = vsel %vm213, %v187, 0.0
    %v243 = vsel %vm214, %v190, 0.0
    %v244 = vsel %vm215, %v193, 0.0
    %v245 = vsel %vm216, %v196, 0.0
    %v246 = vsel %vm217, %v199, 0.0
    %v247 = vsel %vm223, %v242, 0.0
    %v248 = vsel %vm223, %v243, 0.0
    %v249 = vadd.f32 %v247, %v248
    %v250 = vsel %vm223, %v244, 0.0
    %v251 = vadd.f32 %v249, %v250
    %v252 = vsel %vm223, %v245, 0.0
    %v253 = vadd.f32 %v251, %v252
    %v254 = vsel %vm223, %v246, 0.0
    %v255 = vadd.f32 %v253, %v254
    %256 = vadd.xlane.f32.xlu0 %v255
    %v257 = vpop.xlane.xlu0 %256
    %v258 = vrot.slane %v257, 4
    %v259 = vadd.f32 %v257, %v258
    %v260 = vrot.slane %v259, 2
    %v261 = vadd.f32 %v259, %v260
    %v262 = vrot.slane %v261, 1
    %v263 = vadd.f32 %v261, %v262
    %s264 = vtos %v263
    %vm265 = vcmp.eq.s32.totalorder %v202, 0
    %vm266 = vcmp.eq.s32.totalorder %v202, 1
    %v267 = vstv %s241
    %v268 = vsel %vm266, %v267, 0.0
    %v269 = vstv %s264
    %v270 = vsel %vm265, %v269, %v268
    %271 = vst [vmem:[#allocation2] sm:$0xff] %v270
    // Predicated region
    $region14: #{tpu_custom_call.1} parent=1 // pred_check
      _
    $region15: #{tpu_custom_call.1} parent=1 // pred_check_branch
      %273 = sbr.rel (0) target = $region17
    $region16: #{tpu_custom_call.1} parent=1 // pred_region
      %s275 = ssub.s32 128, 128
      %276 = vsyncadd [#allocation3], %s275
      %s278 = sshll.u32 [#allocation2], 4
      %s279 = int_to_ptr.vmem [resolvable:$true] %s278
      %281 = dma.vmem_to_hbm [thread:$0]  %s279, 128, %s3, [#allocation3]
    $region17: #{tpu_custom_call.1} parent=1 // pred_fallthru
      _
    // Predicated region
    $region18: #{tpu_custom_call.1} parent=1 // pred_check
      _
    $region19: #{tpu_custom_call.1} parent=1 // pred_check_branch
      %283 = sbr.rel (0) target = $region21
    $region20: #{tpu_custom_call.1} parent=1 // pred_region
      %284 = dma.done [#allocation3], 128
    $region21: #{tpu_custom_call.1} parent=1 // pred_fallthru
      _
    %285 = vsyncpa [#allocation3], 1

</llo_original>
